<compile_context>
chip_gen: v7x
topology: tpu7x:2x2x1
jax: 0.10.0
libtpu: 0.0.40
codegen_flags: <defaults>
</compile_context>

<pallas_src>
import functools

import jax
import jax.numpy as jnp
from jax.experimental import pallas as pl
from jax.experimental.pallas import tpu as pltpu


_LANE = 128     # lane (last-dim) tile width
_SUBLANE = 8    # f32 sublane tile height


def _round_up(n, m):
    return ((n + m - 1) // m) * m


def _mxu_batch_tile(batch):
    """MXU-matched batch (M) tile: 256 on v6e/v7x, 128 on v5e/others."""
    try:
        kind = jax.devices()[0].device_kind.lower()
    except Exception:  # defensive: unknown backends
        kind = ""
    big_mxu = ("v6" in kind) or ("v7" in kind) or ("7x" in kind)
    tb = 256 if big_mxu else 128
    # Prefer >= 2 grid steps when there is more than one 128-row tile of real
    # work, so the "parallel" batch axis can shard across both TCs on v7x.
    if big_mxu and batch > 128 and _round_up(batch, tb) // tb < 2:
        tb = 128
    return tb


def _fused_mlp_kernel(x_ref, *refs, num_layers):
    """Whole MLP on one batch tile; running activation stays in VMEM/vregs.

    refs = (w0, b0, w1, b1, ..., w_{L-1}, b_{L-1}, o_ref).
    Weights are bf16 (2x MXU throughput, half the VMEM/HBM bytes); the
    activation is cast to bf16 just before each matmul while accumulation,
    bias add, ReLU and Tanh stay in f32.
    """
    o_ref = refs[-1]
    z = x_ref[...]                                   # f32 activation
    for l in range(num_layers):
        w = refs[2 * l][...]                         # bf16 (Kp, Np)
        b = refs[2 * l + 1][...]                     # f32 (1, Np): broadcasts over rows
        z = jnp.dot(z.astype(jnp.bfloat16), w,
                    preferred_element_type=jnp.float32) + b
        if l < num_layers - 1:
            z = jnp.maximum(z, 0.0)                  # hidden ReLU (VPU, f32)
        else:
            z = jnp.tanh(z)                          # output Tanh (EUP, f32)
    o_ref[...] = z.astype(o_ref.dtype)


def init_generator_params(key, in_dim, h_dims, out_dim):
    """Deterministic init matching PyTorch Linear's U(-1/sqrt(fan_in), +)."""
    dims = [in_dim] + list(h_dims) + [out_dim]
    params = []
    for i in range(len(dims) - 1):
        fan_in, fan_out = dims[i], dims[i + 1]
        key, kw, kb = jax.random.split(key, 3)
        bound = 1.0 / jnp.sqrt(jnp.float32(fan_in))
        w = jax.random.uniform(
            kw, (fan_in, fan_out), dtype=jnp.float32, minval=-bound, maxval=bound
        )
        b = jax.random.uniform(
            kb, (fan_out,), dtype=jnp.float32, minval=-bound, maxval=bound
        )
        params.append((w, b))
    return params


def pad_generator_params(params):
    """Zero-pad feature dims to 128-lane multiples and cast weights to bf16.

    Done ONCE at init. Zero padding guarantees padded lanes stay exactly 0
    through matmul + bias + ReLU (+ tanh(0)=0), so they never contaminate
    real outputs. Biases stay f32 (added after the f32 accumulation).
    """
    padded = []
    for w, b in params:
        k, n = w.shape
        kp, np_ = _round_up(k, _LANE), _round_up(n, _LANE)
        wp = jnp.zeros((kp, np_), jnp.bfloat16).at[:k, :n].set(
            w.astype(jnp.bfloat16))
        bp = jnp.zeros((1, np_), jnp.float32).at[0, :n].set(
            b.astype(jnp.float32))
        padded.append((wp, bp))
    return padded


@functools.partial(jax.jit, static_argnames=("out_dim", "batch_tile"))
def _generator_forward_impl(padded_params, x, out_dim, batch_tile):
    B, K = x.shape
    num_layers = len(padded_params)
    Kp = padded_params[0][0].shape[0]
    Np_out = padded_params[-1][0].shape[1]
    tb = batch_tile
    Bp = _round_up(B, tb)

    # Zero-pad the batch/features (zero rows/lanes stay inert; sliced off below).
    x_pad = jnp.zeros((Bp, Kp), jnp.float32).at[:B, :K].set(
        x.astype(jnp.float32))

    grid = (Bp // tb,)

    in_specs = [pl.BlockSpec((tb, Kp), lambda i: (i, 0))]
    flat_wb = []
    max_np = Np_out
    for w, b in padded_params:
        kp, np_ = w.shape
        max_np = max(max_np, np_)
        # Grid-invariant index maps: weights/biases are DMA'd once and stay
        # VMEM-resident across every batch tile.
        in_specs.append(pl.BlockSpec((kp, np_), lambda i: (0, 0)))
        in_specs.append(pl.BlockSpec((1, np_), lambda i: (0, 0)))
        flat_wb.extend([w, b])

    # Explicit VMEM budget: 2x (double-buffered) inputs + live activation,
    # with headroom; floored at 32 MiB, capped at v7x's 64 MiB physical.
    wb_bytes = sum(w.size * w.dtype.itemsize + b.size * b.dtype.itemsize
                   for w, b in padded_params)
    io_bytes = (tb * Kp + tb * Np_out) * 4
    act_bytes = tb * max_np * (4 + 2)          # f32 activation + bf16 matmul copy
    need = int(2 * (wb_bytes + io_bytes) * 1.3) + act_bytes + (4 << 20)
    vmem_limit = min(max(need, 32 << 20), 64 << 20)

    kernel = functools.partial(_fused_mlp_kernel, num_layers=num_layers)
    y_pad = pl.pallas_call(
        kernel,
        out_shape=jax.ShapeDtypeStruct((Bp, Np_out), jnp.float32),
        grid=grid,
        in_specs=in_specs,
        out_specs=pl.BlockSpec((tb, Np_out), lambda i: (i, 0)),
        compiler_params=pltpu.CompilerParams(
            dimension_semantics=("parallel",),
            vmem_limit_bytes=vmem_limit,
        ),
    )(x_pad, *flat_wb)

    # Strip the padding added above.
    return y_pad[:B, :out_dim]


def generator_forward(padded_params, x, out_dim):
    """Fused forward pass. `padded_params` comes from pad_generator_params()."""
    tb = _mxu_batch_tile(x.shape[0])
    return _generator_forward_impl(padded_params, x, out_dim, tb)


def generator_reference(params, x, compute_dtype=jnp.float32):
    """Pure-JAX reference (unpadded). compute_dtype controls matmul-input
    precision so the bf16-weight kernel can be checked at matching precision."""
    z = x
    num_layers = len(params)
    for i, (w, b) in enumerate(params):
        z = jnp.dot(z.astype(compute_dtype), w.astype(compute_dtype),
                    preferred_element_type=jnp.float32) + b.astype(jnp.float32)
        z = jnp.maximum(z, 0.0) if i < num_layers - 1 else jnp.tanh(z)
    return z


if __name__ == "__main__":
    # Small, forward-consistent shapes.
    batch, in_dim, h_dims, out_dim = 2, 16, [32, 32], 8

    key = jax.random.PRNGKey(0)
    key, kx = jax.random.split(key)
    x = jax.random.normal(kx, (batch, in_dim), dtype=jnp.float32)

    params = init_generator_params(key, in_dim, h_dims, out_dim)
    padded_params = pad_generator_params(params)   # zero-padded + bf16, once

    out = generator_forward(padded_params, x, out_dim)
    out = jax.block_until_ready(out)

    assert out.shape == (batch, out_dim), out.shape

    # bf16 matmul inputs with f32 accumulation: tight check against a
    # matching-precision reference, loose check against the full-f32 one.
    ref_bf16 = generator_reference(params, x, compute_dtype=jnp.bfloat16)
    ref_f32 = generator_reference(params, x, compute_dtype=jnp.float32)
    assert jnp.allclose(out, ref_bf16, atol=1e-3, rtol=1e-3), \
        "mismatch vs matching-precision (bf16) reference"
    assert jnp.allclose(out, ref_f32, atol=3e-2, rtol=3e-2), \
        "mismatch vs f32 reference"

    print("KERNEL_OK")
</pallas_src>

<mosaic_0001>
module attributes {stable_mosaic.version = 11 : i64} {
  func.func @_fused_mlp_kernel(%arg0: i32, %arg1: memref<128x128xf32, #tpu.memory_space<vmem>>, %arg2: memref<128x128xbf16, #tpu.memory_space<vmem>>, %arg3: memref<1x128xf32, #tpu.memory_space<vmem>>, %arg4: memref<128x128xbf16, #tpu.memory_space<vmem>>, %arg5: memref<1x128xf32, #tpu.memory_space<vmem>>, %arg6: memref<128x128xbf16, #tpu.memory_space<vmem>>, %arg7: memref<1x128xf32, #tpu.memory_space<vmem>>, %arg8: memref<128x128xf32, #tpu.memory_space<vmem>>) attributes {dimension_semantics = [#tpu.dimension_semantics<parallel>], iteration_bounds = array<i64: 1>, scalar_prefetch = 0 : i64, scratch_operands = 0 : i64, tpu.core_type = #tpu.core_type<tc>, window_params = [{transform_indices = @transform_0, window_bounds = array<i64: 128, 128>}, {pipeline_mode = #tpu.pipeline_mode<synchronous>, transform_indices = @transform_1, window_bounds = array<i64: 128, 128>}, {pipeline_mode = #tpu.pipeline_mode<synchronous>, transform_indices = @transform_2, window_bounds = array<i64: 1, 128>}, {pipeline_mode = #tpu.pipeline_mode<synchronous>, transform_indices = @transform_3, window_bounds = array<i64: 128, 128>}, {pipeline_mode = #tpu.pipeline_mode<synchronous>, transform_indices = @transform_4, window_bounds = array<i64: 1, 128>}, {pipeline_mode = #tpu.pipeline_mode<synchronous>, transform_indices = @transform_5, window_bounds = array<i64: 128, 128>}, {pipeline_mode = #tpu.pipeline_mode<synchronous>, transform_indices = @transform_6, window_bounds = array<i64: 1, 128>}, {transform_indices = @transform_7, window_bounds = array<i64: 128, 128>}]} {
    %c0 = arith.constant 0 : index
    %c0_0 = arith.constant 0 : index
    %0 = vector.load %arg1[%c0, %c0_0] : memref<128x128xf32, #tpu.memory_space<vmem>>, vector<128x128xf32>
    %c0_1 = arith.constant 0 : index
    %c0_2 = arith.constant 0 : index
    %1 = vector.load %arg2[%c0_1, %c0_2] : memref<128x128xbf16, #tpu.memory_space<vmem>>, vector<128x128xbf16>
    %c0_3 = arith.constant 0 : index
    %c0_4 = arith.constant 0 : index
    %2 = vector.load %arg3[%c0_3, %c0_4] : memref<1x128xf32, #tpu.memory_space<vmem>>, vector<1x128xf32>
    %3 = arith.truncf %0 : vector<128x128xf32> to vector<128x128xbf16>
    %cst = arith.constant dense<0.000000e+00> : vector<128x128xf32>
    %4 = tpu.matmul %3, %1, %cst {dimension_numbers = #tpu.dot_dimension_numbers<[1], [0], [0], [1], [0, 0, 1, 1], [], []>} : vector<128x128xbf16>, vector<128x128xbf16>, vector<128x128xf32> -> vector<128x128xf32>
    %5 = vector.broadcast %2 : vector<1x128xf32> to vector<128x128xf32>
    %6 = arith.addf %4, %5 : vector<128x128xf32>
    %cst_5 = arith.constant 0.000000e+00 : f32
    %7 = vector.broadcast %cst_5 : f32 to vector<128x128xf32>
    %8 = arith.maximumf %6, %7 : vector<128x128xf32>
    %c0_6 = arith.constant 0 : index
    %c0_7 = arith.constant 0 : index
    %9 = vector.load %arg4[%c0_6, %c0_7] : memref<128x128xbf16, #tpu.memory_space<vmem>>, vector<128x128xbf16>
    %c0_8 = arith.constant 0 : index
    %c0_9 = arith.constant 0 : index
    %10 = vector.load %arg5[%c0_8, %c0_9] : memref<1x128xf32, #tpu.memory_space<vmem>>, vector<1x128xf32>
    %11 = arith.truncf %8 : vector<128x128xf32> to vector<128x128xbf16>
    %cst_10 = arith.constant dense<0.000000e+00> : vector<128x128xf32>
    %12 = tpu.matmul %11, %9, %cst_10 {dimension_numbers = #tpu.dot_dimension_numbers<[1], [0], [0], [1], [0, 0, 1, 1], [], []>} : vector<128x128xbf16>, vector<128x128xbf16>, vector<128x128xf32> -> vector<128x128xf32>
    %13 = vector.broadcast %10 : vector<1x128xf32> to vector<128x128xf32>
    %14 = arith.addf %12, %13 : vector<128x128xf32>
    %cst_11 = arith.constant 0.000000e+00 : f32
    %15 = vector.broadcast %cst_11 : f32 to vector<128x128xf32>
    %16 = arith.maximumf %14, %15 : vector<128x128xf32>
    %c0_12 = arith.constant 0 : index
    %c0_13 = arith.constant 0 : index
    %17 = vector.load %arg6[%c0_12, %c0_13] : memref<128x128xbf16, #tpu.memory_space<vmem>>, vector<128x128xbf16>
    %c0_14 = arith.constant 0 : index
    %c0_15 = arith.constant 0 : index
    %18 = vector.load %arg7[%c0_14, %c0_15] : memref<1x128xf32, #tpu.memory_space<vmem>>, vector<1x128xf32>
    %19 = arith.truncf %16 : vector<128x128xf32> to vector<128x128xbf16>
    %cst_16 = arith.constant dense<0.000000e+00> : vector<128x128xf32>
    %20 = tpu.matmul %19, %17, %cst_16 {dimension_numbers = #tpu.dot_dimension_numbers<[1], [0], [0], [1], [0, 0, 1, 1], [], []>} : vector<128x128xbf16>, vector<128x128xbf16>, vector<128x128xf32> -> vector<128x128xf32>
    %21 = vector.broadcast %18 : vector<1x128xf32> to vector<128x128xf32>
    %22 = arith.addf %20, %21 : vector<128x128xf32>
    %23 = math.tanh %22 : vector<128x128xf32>
    %c0_17 = arith.constant 0 : index
    %c0_18 = arith.constant 0 : index
    %24 = vector.load %arg8[%c0_17, %c0_18] : memref<128x128xf32, #tpu.memory_space<vmem>>, vector<128x128xf32>
    tpu.vector_store %arg8[%c0_17, %c0_18], %23 {strides = array<i32>} : memref<128x128xf32, #tpu.memory_space<vmem>>, vector<128x128xf32>,
    return
  }
  func.func @transform_0(%arg0: i32) -> (i32, i32) {
    %c0_i32 = arith.constant 0 : i32
    %c0_i32_0 = arith.constant 0 : i32
    return %arg0, %c0_i32 : i32, i32
  }
  func.func @transform_1(%arg0: i32) -> (i32, i32) {
    %c0_i32 = arith.constant 0 : i32
    %c0_i32_0 = arith.constant 0 : i32
    %c0_i32_1 = arith.constant 0 : i32
    return %c0_i32, %c0_i32_0 : i32, i32
  }
  func.func @transform_2(%arg0: i32) -> (i32, i32) {
    %c0_i32 = arith.constant 0 : i32
    %c0_i32_0 = arith.constant 0 : i32
    %c0_i32_1 = arith.constant 0 : i32
    return %c0_i32, %c0_i32_0 : i32, i32
  }
  func.func @transform_3(%arg0: i32) -> (i32, i32) {
    %c0_i32 = arith.constant 0 : i32
    %c0_i32_0 = arith.constant 0 : i32
    %c0_i32_1 = arith.constant 0 : i32
    return %c0_i32, %c0_i32_0 : i32, i32
  }
  func.func @transform_4(%arg0: i32) -> (i32, i32) {
    %c0_i32 = arith.constant 0 : i32
    %c0_i32_0 = arith.constant 0 : i32
    %c0_i32_1 = arith.constant 0 : i32
    return %c0_i32, %c0_i32_0 : i32, i32
  }
  func.func @transform_5(%arg0: i32) -> (i32, i32) {
    %c0_i32 = arith.constant 0 : i32
    %c0_i32_0 = arith.constant 0 : i32
    %c0_i32_1 = arith.constant 0 : i32
    return %c0_i32, %c0_i32_0 : i32, i32
  }
  func.func @transform_6(%arg0: i32) -> (i32, i32) {
    %c0_i32 = arith.constant 0 : i32
    %c0_i32_0 = arith.constant 0 : i32
    %c0_i32_1 = arith.constant 0 : i32
    return %c0_i32, %c0_i32_0 : i32, i32
  }
  func.func @transform_7(%arg0: i32) -> (i32, i32) {
    %c0_i32 = arith.constant 0 : i32
    %c0_i32_0 = arith.constant 0 : i32
    return %arg0, %c0_i32 : i32, i32
  }
}

</mosaic_0001>

<llo_original>
// kernel: _generator_forward_impl.1
$region0: #{_generator_forward_impl.1}
  #allocation0 [shape = 'u32[]', space=smem, size = 0x4, offset = 0x4, fixed_abs, tag = 'smem constant byte address 0x4 - core index']
  #allocation1 [shape = 'u32[144,128]{1,0:T(1,128)}', space=vmem, size = 0x12000, scoped, tag = 'internal scratch']
  %s0 = inlined_call_operand.vmem [shape: f32[128,128], index: 0, kind: input, shape index: {}]
  %s1 = inlined_call_operand.vmem [shape: bf16[128,128], index: 1, kind: input, shape index: {}]
  %s2 = inlined_call_operand.vmem [shape: f32[1,128], index: 2, kind: input, shape index: {}]
  %s3 = inlined_call_operand.vmem [shape: bf16[128,128], index: 3, kind: input, shape index: {}]
  %s4 = inlined_call_operand.vmem [shape: f32[1,128], index: 4, kind: input, shape index: {}]
  %s5 = inlined_call_operand.hbm [shape: bf16[128,128], index: 5, kind: input, shape index: {}]
  %s6 = inlined_call_operand.vmem [shape: f32[1,128], index: 6, kind: input, shape index: {}]
  %s7 = inlined_call_operand.vmem [shape: f32[128,128], index: 7, kind: output, shape index: {}]
  %s8 = sld [smem:[#allocation0]]
  $region42: #{_generator_forward_impl.1} parent=0
    _
  %s10 = ssub.s32 1, %s8
  %s11 = scalar_select 0, %s10, %s8
  $region1: #{_generator_forward_impl.1} parent=0
    #allocation2 [shape = 'u8[32768]{0}', space=vmem, size = 0x8000, scoped, tag = 'input window, operand 5, single buffered']
    #allocation3 [shape = 's32[1]{0}', space=sflag, size = 0x4, scoped, tag = 'scoped memory for _generator_forward_impl.1']
    %12 = vsyncpa [#allocation3], 0
    // Predicated region
    $region2: #{_generator_forward_impl.1} parent=1 // pred_check
      _
    $region3: #{_generator_forward_impl.1} parent=1 // pred_check_branch
      %14 = sbr.rel (0) target = $region5
    $region4: #{_generator_forward_impl.1} parent=1 // pred_region
      _
    $region5: #{_generator_forward_impl.1} parent=1 // pred_fallthru
      _
    // Predicated region
    $region6: #{_generator_forward_impl.1} parent=1 // pred_check
      _
    $region7: #{_generator_forward_impl.1} parent=1 // pred_check_branch
      %16 = sbr.rel (0) target = $region9
    $region8: #{_generator_forward_impl.1} parent=1 // pred_region
      _
    $region9: #{_generator_forward_impl.1} parent=1 // pred_fallthru
      _
    // Predicated region
    $region10: #{_generator_forward_impl.1} parent=1 // pred_check
      _
    $region11: #{_generator_forward_impl.1} parent=1 // pred_check_branch
      %18 = sbr.rel (0) target = $region13
    $region12: #{_generator_forward_impl.1} parent=1 // pred_region
      _
    $region13: #{_generator_forward_impl.1} parent=1 // pred_fallthru
      _
    // Predicated region
    $region14: #{_generator_forward_impl.1} parent=1 // pred_check
      _
    $region15: #{_generator_forward_impl.1} parent=1 // pred_check_branch
      %20 = sbr.rel (0) target = $region17
    $region16: #{_generator_forward_impl.1} parent=1 // pred_region
      _
    $region17: #{_generator_forward_impl.1} parent=1 // pred_fallthru
      _
    // Predicated region
    $region18: #{_generator_forward_impl.1} parent=1 // pred_check
      _
    $region19: #{_generator_forward_impl.1} parent=1 // pred_check_branch
      %22 = sbr.rel (0) target = $region21
    $region20: #{_generator_forward_impl.1} parent=1 // pred_region
      _
    $region21: #{_generator_forward_impl.1} parent=1 // pred_fallthru
      _
    // Predicated region
    $region22: #{_generator_forward_impl.1} parent=1 // pred_check
      _
    $region23: #{_generator_forward_impl.1} parent=1 // pred_check_branch
      %24 = sbr.rel (0) target = $region25
    $region24: #{_generator_forward_impl.1} parent=1 // pred_region
      %s26 = ssub.s32 1024, 1024
      %27 = vsyncadd [#allocation3], %s26
      %s28 = sshll.u32 [#allocation2], 4
      %s29 = int_to_ptr.vmem [resolvable:$true] %s28
      %34 = dma.hbm_to_vmem [thread:$0]  %s5, 1024, %s29, [#allocation3], 64, 64, 4
    $region25: #{_generator_forward_impl.1} parent=1 // pred_fallthru
      _
    // Predicated region
    $region26: #{_generator_forward_impl.1} parent=1 // pred_check
      _
    $region27: #{_generator_forward_impl.1} parent=1 // pred_check_branch
      %36 = sbr.rel (0) target = $region29
    $region28: #{_generator_forward_impl.1} parent=1 // pred_region
      _
    $region29: #{_generator_forward_impl.1} parent=1 // pred_fallthru
      _
    // Predicated region
    $region30: #{_generator_forward_impl.1} parent=1 // pred_check
      _
    $region31: #{_generator_forward_impl.1} parent=1 // pred_check_branch
      %38 = sbr.rel (0) target = $region33
    $region32: #{_generator_forward_impl.1} parent=1 // pred_region
      %39 = dma.done [#allocation3], 1024
    $region33: #{_generator_forward_impl.1} parent=1 // pred_fallthru
      _
    %v41 = vld [vmem:[%s0] sm:$0xff]
    %v42 = vld [vmem:[%s0 + $0x8] sm:$0xff]
    %v43 = vld [vmem:[%s0 + $0x10] sm:$0xff]
    %v44 = vld [vmem:[%s0 + $0x18] sm:$0xff]
    %v45 = vld [vmem:[%s0 + $0x20] sm:$0xff]
    %v46 = vld [vmem:[%s0 + $0x28] sm:$0xff]
    %v47 = vld [vmem:[%s0 + $0x30] sm:$0xff]
    %v48 = vld [vmem:[%s0 + $0x38] sm:$0xff]
    %v49 = vld [vmem:[%s0 + $0x40] sm:$0xff]
    %v50 = vld [vmem:[%s0 + $0x48] sm:$0xff]
    %v51 = vld [vmem:[%s0 + $0x50] sm:$0xff]
    %v52 = vld [vmem:[%s0 + $0x58] sm:$0xff]
    %v53 = vld [vmem:[%s0 + $0x60] sm:$0xff]
    %v54 = vld [vmem:[%s0 + $0x68] sm:$0xff]
    %v55 = vld [vmem:[%s0 + $0x70] sm:$0xff]
    %v56 = vld [vmem:[%s0 + $0x78] sm:$0xff]
    %v57 = vld [vmem:[%s1] sm:$0xf]
    %v58 = vld [vmem:[%s1 + $0x4] sm:$0xf]
    %v59 = vld [vmem:[%s1 + $0x8] sm:$0xf]
    %v60 = vld [vmem:[%s1 + $0xc] sm:$0xf]
    %v61 = vld [vmem:[%s1 + $0x10] sm:$0xf]
    %v62 = vld [vmem:[%s1 + $0x14] sm:$0xf]
    %v63 = vld [vmem:[%s1 + $0x18] sm:$0xf]
    %v64 = vld [vmem:[%s1 + $0x1c] sm:$0xf]
    %v65 = vld [vmem:[%s1 + $0x20] sm:$0xf]
    %v66 = vld [vmem:[%s1 + $0x24] sm:$0xf]
    %v67 = vld [vmem:[%s1 + $0x28] sm:$0xf]
    %v68 = vld [vmem:[%s1 + $0x2c] sm:$0xf]
    %v69 = vld [vmem:[%s1 + $0x30] sm:$0xf]
    %v70 = vld [vmem:[%s1 + $0x34] sm:$0xf]
    %v71 = vld [vmem:[%s1 + $0x38] sm:$0xf]
    %v72 = vld [vmem:[%s1 + $0x3c] sm:$0xf]
    %v73 = vld [vmem:[%s2] sm:$0x1]
    %v74 = vpack.c.bf16 %v42, %v41
    %v75 = vpack.c.bf16 %v44, %v43
    %v76 = vpack.c.bf16 %v46, %v45
    %v77 = vpack.c.bf16 %v48, %v47
    %v78 = vpack.c.bf16 %v50, %v49
    %v79 = vpack.c.bf16 %v52, %v51
    %v80 = vpack.c.bf16 %v54, %v53
    %v81 = vpack.c.bf16 %v56, %v55
    %v83 = vlaneseq
    %v84 = vshrl.u32 %v83, 7
    %v85 = vsub.s32 0, %v84
    %v86 = vrot.slane %v73, %v85
    %v104 = vunpack.c.l.b16 %v57
    %v105 = vunpack.c.l.b16 %v58
    %v106 = vunpack.c.l.b16 %v59
    %v107 = vunpack.c.l.b16 %v60
    %v108 = vunpack.c.l.b16 %v61
    %v109 = vunpack.c.l.b16 %v62
    %v110 = vunpack.c.l.b16 %v63
    %v111 = vunpack.c.l.b16 %v64
    %v112 = vunpack.c.l.b16 %v65
    %v113 = vunpack.c.l.b16 %v66
    %v114 = vunpack.c.l.b16 %v67
    %v115 = vunpack.c.l.b16 %v68
    %v116 = vunpack.c.l.b16 %v69
    %v117 = vunpack.c.l.b16 %v70
    %v118 = vunpack.c.l.b16 %v71
    %v119 = vunpack.c.l.b16 %v72
    %v120 = vpack.c.b16 %v105, %v104
    %v121 = vpack.c.b16 %v107, %v106
    %v122 = vpack.c.b16 %v109, %v108
    %v123 = vpack.c.b16 %v111, %v110
    %v124 = vpack.c.b16 %v113, %v112
    %v125 = vpack.c.b16 %v115, %v114
    %v126 = vpack.c.b16 %v117, %v116
    %v127 = vpack.c.b16 %v119, %v118
    %136 = vmatprep.subr.bf16.mxu0 0
    %137 = vmatpush1.bf16.msra.mxu0 %v120
    %138 = vmatprep.subr.bf16.mxu0 0
    %139 = vmatpush1.bf16.msra.mxu0 %v121
    %140 = vmatprep.subr.bf16.mxu0 0
    %141 = vmatpush1.bf16.msra.mxu0 %v122
    %142 = vmatprep.subr.bf16.mxu0 0
    %143 = vmatpush1.bf16.msra.mxu0 %v123
    %144 = vmatprep.subr.bf16.mxu0 0
    %145 = vmatpush1.bf16.msra.mxu0 %v124
    %146 = vmatprep.subr.bf16.mxu0 0
    %147 = vmatpush1.bf16.msra.mxu0 %v125
    %148 = vmatprep.subr.bf16.mxu0 0
    %149 = vmatpush1.bf16.msra.mxu0 %v126
    %150 = vmatprep.subr.bf16.mxu0 0
    %151 = vmatpush1.bf16.msra.mxu0 %v127
    %152 = vmatprep.subr.bf16.mxu0 0
    %153 = vmatpush1.bf16.msra.mxu0 0
    %154 = vmatprep.subr.bf16.mxu0 0
    %155 = vmatpush1.bf16.msra.mxu0 0
    %156 = vmatprep.subr.bf16.mxu0 0
    %157 = vmatpush1.bf16.msra.mxu0 0
    %158 = vmatprep.subr.bf16.mxu0 0
    %159 = vmatpush1.bf16.msra.mxu0 0
    %160 = vmatprep.subr.bf16.mxu0 0
    %161 = vmatpush1.bf16.msra.mxu0 0
    %162 = vmatprep.subr.bf16.mxu0 0
    %163 = vmatpush1.bf16.msra.mxu0 0
    %164 = vmatprep.subr.bf16.mxu0 0
    %165 = vmatpush1.bf16.msra.mxu0 0
    %166 = vmatprep.subr.bf16.mxu0 0
    %167 = vmatpush1.bf16.msra.mxu0 0
    %168 = vmatprep.mubr.bf16.mxu0 0
    %169 = vmatmul.mubr.bf16.gmra.mrb[0].mxu0 %v74
    %v170 = vpop.f32.mrb[0].mxu0
    %v171 = vadd.f32 %v86, %v170
    %v172 = vpop.f32.mrb[0].mxu0
    %v173 = vpop.f32.mrb[0].mxu0
    %v174 = vadd.f32 %v86, %v173
    %v175 = vpop.f32.mrb[0].mxu0
    %176 = vmatprep.mubr.bf16.mxu0 0
    %177 = vmatmul.mubr.bf16.gmra.mrb[0].mxu0 %v75
    %v178 = vpop.f32.mrb[0].mxu0
    %v179 = vadd.f32 %v86, %v178
    %v180 = vpop.f32.mrb[0].mxu0
    %v181 = vpop.f32.mrb[0].mxu0
    %v182 = vadd.f32 %v86, %v181
    %v183 = vpop.f32.mrb[0].mxu0
    %184 = vmatprep.mubr.bf16.mxu0 0
    %185 = vmatmul.mubr.bf16.gmra.mrb[0].mxu0 %v76
    %v186 = vpop.f32.mrb[0].mxu0
    %v187 = vadd.f32 %v86, %v186
    %v188 = vpop.f32.mrb[0].mxu0
    %v189 = vpop.f32.mrb[0].mxu0
    %v190 = vadd.f32 %v86, %v189
    %v191 = vpop.f32.mrb[0].mxu0
    %192 = vmatprep.mubr.bf16.mxu0 0
    %193 = vmatmul.mubr.bf16.gmra.mrb[0].mxu0 %v77
    %v194 = vpop.f32.mrb[0].mxu0
    %v195 = vadd.f32 %v86, %v194
    %v196 = vpop.f32.mrb[0].mxu0
    %v197 = vpop.f32.mrb[0].mxu0
    %v198 = vadd.f32 %v86, %v197
    %v199 = vpop.f32.mrb[0].mxu0
    %200 = vmatprep.mubr.bf16.mxu0 0
    %201 = vmatmul.mubr.bf16.gmra.mrb[0].mxu0 %v78
    %v202 = vpop.f32.mrb[0].mxu0
    %v203 = vadd.f32 %v86, %v202
    %v204 = vpop.f32.mrb[0].mxu0
    %v205 = vpop.f32.mrb[0].mxu0
    %v206 = vadd.f32 %v86, %v205
    %v207 = vpop.f32.mrb[0].mxu0
    %208 = vmatprep.mubr.bf16.mxu0 0
    %209 = vmatmul.mubr.bf16.gmra.mrb[0].mxu0 %v79
    %v210 = vpop.f32.mrb[0].mxu0
    %v211 = vadd.f32 %v86, %v210
    %v212 = vpop.f32.mrb[0].mxu0
    %v213 = vpop.f32.mrb[0].mxu0
    %v214 = vadd.f32 %v86, %v213
    %v215 = vpop.f32.mrb[0].mxu0
    %216 = vmatprep.mubr.bf16.mxu0 0
    %217 = vmatmul.mubr.bf16.gmra.mrb[0].mxu0 %v80
    %v218 = vpop.f32.mrb[0].mxu0
    %v219 = vadd.f32 %v86, %v218
    %v220 = vpop.f32.mrb[0].mxu0
    %v221 = vpop.f32.mrb[0].mxu0
    %v222 = vadd.f32 %v86, %v221
    %v223 = vpop.f32.mrb[0].mxu0
    %224 = vmatprep.mubr.bf16.mxu0 0
    %225 = vmatmul.mubr.bf16.gmra.mrb[0].mxu0 %v81
    %v226 = vpop.f32.mrb[0].mxu0
    %v227 = vadd.f32 %v86, %v226
    %v228 = vpop.f32.mrb[0].mxu0
    %v229 = vpop.f32.mrb[0].mxu0
    %v230 = vadd.f32 %v86, %v229
    %v231 = vpop.f32.mrb[0].mxu0
    %232 = vdwg.mxu0
    %v233 = vmax.f32 %v171, 0.0
    %v234 = vmax.f32 %v174, 0.0
    %v235 = vmax.f32 %v179, 0.0
    %v236 = vmax.f32 %v182, 0.0
    %v237 = vmax.f32 %v187, 0.0
    %v238 = vmax.f32 %v190, 0.0
    %v239 = vmax.f32 %v195, 0.0
    %v240 = vmax.f32 %v198, 0.0
    %v241 = vmax.f32 %v203, 0.0
    %v242 = vmax.f32 %v206, 0.0
    %v243 = vmax.f32 %v211, 0.0
    %v244 = vmax.f32 %v214, 0.0
    %v245 = vmax.f32 %v219, 0.0
    %v246 = vmax.f32 %v222, 0.0
    %v247 = vmax.f32 %v227, 0.0
    %v248 = vmax.f32 %v230, 0.0
    %v249 = vld [vmem:[%s3] sm:$0xf]
    %v250 = vld [vmem:[%s3 + $0x4] sm:$0xf]
    %v251 = vld [vmem:[%s3 + $0x8] sm:$0xf]
    %v252 = vld [vmem:[%s3 + $0xc] sm:$0xf]
    %v253 = vld [vmem:[%s3 + $0x10] sm:$0xf]
    %v254 = vld [vmem:[%s3 + $0x14] sm:$0xf]
    %v255 = vld [vmem:[%s3 + $0x18] sm:$0xf]
    %v256 = vld [vmem:[%s3 + $0x1c] sm:$0xf]
    %v257 = vld [vmem:[%s3 + $0x20] sm:$0xf]
    %v258 = vld [vmem:[%s3 + $0x24] sm:$0xf]
    %v259 = vld [vmem:[%s3 + $0x28] sm:$0xf]
    %v260 = vld [vmem:[%s3 + $0x2c] sm:$0xf]
    %v261 = vld [vmem:[%s3 + $0x30] sm:$0xf]
    %v262 = vld [vmem:[%s3 + $0x34] sm:$0xf]
    %v263 = vld [vmem:[%s3 + $0x38] sm:$0xf]
    %v264 = vld [vmem:[%s3 + $0x3c] sm:$0xf]
    %v265 = vld [vmem:[%s4] sm:$0x1]
    %v266 = vpack.c.bf16 %v234, %v233
    %v267 = vpack.c.bf16 %v236, %v235
    %v268 = vpack.c.bf16 %v238, %v237
    %v269 = vpack.c.bf16 %v240, %v239
    %v270 = vpack.c.bf16 %v242, %v241
    %v271 = vpack.c.bf16 %v244, %v243
    %v272 = vpack.c.bf16 %v246, %v245
    %v273 = vpack.c.bf16 %v248, %v247
    %v275 = vlaneseq
    %v276 = vshrl.u32 %v275, 7
    %v277 = vsub.s32 0, %v276
    %v278 = vrot.slane %v265, %v277
    %v296 = vunpack.c.l.b16 %v249
    %v297 = vunpack.c.l.b16 %v250
    %v298 = vunpack.c.l.b16 %v251
    %v299 = vunpack.c.l.b16 %v252
    %v300 = vunpack.c.l.b16 %v253
    %v301 = vunpack.c.l.b16 %v254
    %v302 = vunpack.c.l.b16 %v255
    %v303 = vunpack.c.l.b16 %v256
    %v304 = vunpack.c.l.b16 %v257
    %v305 = vunpack.c.l.b16 %v258
    %v306 = vunpack.c.l.b16 %v259
    %v307 = vunpack.c.l.b16 %v260
    %v308 = vunpack.c.l.b16 %v261
    %v309 = vunpack.c.l.b16 %v262
    %v310 = vunpack.c.l.b16 %v263
    %v311 = vunpack.c.l.b16 %v264
    %v312 = vpack.c.b16 %v297, %v296
    %v313 = vpack.c.b16 %v299, %v298
    %v314 = vpack.c.b16 %v301, %v300
    %v315 = vpack.c.b16 %v303, %v302
    %v316 = vpack.c.b16 %v305, %v304
    %v317 = vpack.c.b16 %v307, %v306
    %v318 = vpack.c.b16 %v309, %v308
    %v319 = vpack.c.b16 %v311, %v310
    %328 = vmatprep.subr.bf16.mxu0 0
    %329 = vmatpush1.bf16.msra.mxu0 %v312
    %330 = vmatprep.subr.bf16.mxu0 0
    %331 = vmatpush1.bf16.msra.mxu0 %v313
    %332 = vmatprep.subr.bf16.mxu0 0
    %333 = vmatpush1.bf16.msra.mxu0 %v314
    %334 = vmatprep.subr.bf16.mxu0 0
    %335 = vmatpush1.bf16.msra.mxu0 %v315
    %336 = vmatprep.subr.bf16.mxu0 0
    %337 = vmatpush1.bf16.msra.mxu0 %v316
    %338 = vmatprep.subr.bf16.mxu0 0
    %339 = vmatpush1.bf16.msra.mxu0 %v317
    %340 = vmatprep.subr.bf16.mxu0 0
    %341 = vmatpush1.bf16.msra.mxu0 %v318
    %342 = vmatprep.subr.bf16.mxu0 0
    %343 = vmatpush1.bf16.msra.mxu0 %v319
    %344 = vmatprep.subr.bf16.mxu0 0
    %345 = vmatpush1.bf16.msra.mxu0 0
    %346 = vmatprep.subr.bf16.mxu0 0
    %347 = vmatpush1.bf16.msra.mxu0 0
    %348 = vmatprep.subr.bf16.mxu0 0
    %349 = vmatpush1.bf16.msra.mxu0 0
    %350 = vmatprep.subr.bf16.mxu0 0
    %351 = vmatpush1.bf16.msra.mxu0 0
    %352 = vmatprep.subr.bf16.mxu0 0
    %353 = vmatpush1.bf16.msra.mxu0 0
    %354 = vmatprep.subr.bf16.mxu0 0
    %355 = vmatpush1.bf16.msra.mxu0 0
    %356 = vmatprep.subr.bf16.mxu0 0
    %357 = vmatpush1.bf16.msra.mxu0 0
    %358 = vmatprep.subr.bf16.mxu0 0
    %359 = vmatpush1.bf16.msra.mxu0 0
    %360 = vmatprep.mubr.bf16.mxu0 0
    %361 = vmatmul.mubr.bf16.gmra.mrb[0].mxu0 %v266
    %v362 = vpop.f32.mrb[0].mxu0
    %v363 = vadd.f32 %v278, %v362
    %v364 = vpop.f32.mrb[0].mxu0
    %v365 = vpop.f32.mrb[0].mxu0
    %v366 = vadd.f32 %v278, %v365
    %v367 = vpop.f32.mrb[0].mxu0
    %368 = vmatprep.mubr.bf16.mxu0 0
    %369 = vmatmul.mubr.bf16.gmra.mrb[0].mxu0 %v267
    %v370 = vpop.f32.mrb[0].mxu0
    %v371 = vadd.f32 %v278, %v370
    %v372 = vpop.f32.mrb[0].mxu0
    %v373 = vpop.f32.mrb[0].mxu0
    %v374 = vadd.f32 %v278, %v373
    %v375 = vpop.f32.mrb[0].mxu0
    %376 = vmatprep.mubr.bf16.mxu0 0
    %377 = vmatmul.mubr.bf16.gmra.mrb[0].mxu0 %v268
    %v378 = vpop.f32.mrb[0].mxu0
    %v379 = vadd.f32 %v278, %v378
    %v380 = vpop.f32.mrb[0].mxu0
    %v381 = vpop.f32.mrb[0].mxu0
    %v382 = vadd.f32 %v278, %v381
    %v383 = vpop.f32.mrb[0].mxu0
    %384 = vmatprep.mubr.bf16.mxu0 0
    %385 = vmatmul.mubr.bf16.gmra.mrb[0].mxu0 %v269
    %v386 = vpop.f32.mrb[0].mxu0
    %v387 = vadd.f32 %v278, %v386
    %v388 = vpop.f32.mrb[0].mxu0
    %v389 = vpop.f32.mrb[0].mxu0
    %v390 = vadd.f32 %v278, %v389
    %v391 = vpop.f32.mrb[0].mxu0
    %392 = vmatprep.mubr.bf16.mxu0 0
    %393 = vmatmul.mubr.bf16.gmra.mrb[0].mxu0 %v270
    %v394 = vpop.f32.mrb[0].mxu0
    %v395 = vadd.f32 %v278, %v394
    %v396 = vpop.f32.mrb[0].mxu0
    %v397 = vpop.f32.mrb[0].mxu0
    %v398 = vadd.f32 %v278, %v397
    %v399 = vpop.f32.mrb[0].mxu0
    %400 = vmatprep.mubr.bf16.mxu0 0
    %401 = vmatmul.mubr.bf16.gmra.mrb[0].mxu0 %v271
    %v402 = vpop.f32.mrb[0].mxu0
    %v403 = vadd.f32 %v278, %v402
    %v404 = vpop.f32.mrb[0].mxu0
    %v405 = vpop.f32.mrb[0].mxu0
    %v406 = vadd.f32 %v278, %v405
    %v407 = vpop.f32.mrb[0].mxu0
    %408 = vmatprep.mubr.bf16.mxu0 0
    %409 = vmatmul.mubr.bf16.gmra.mrb[0].mxu0 %v272
    %v410 = vpop.f32.mrb[0].mxu0
    %v411 = vadd.f32 %v278, %v410
    %v412 = vpop.f32.mrb[0].mxu0
    %v413 = vpop.f32.mrb[0].mxu0
    %v414 = vadd.f32 %v278, %v413
    %v415 = vpop.f32.mrb[0].mxu0
    %416 = vmatprep.mubr.bf16.mxu0 0
    %417 = vmatmul.mubr.bf16.gmra.mrb[0].mxu0 %v273
    %v418 = vpop.f32.mrb[0].mxu0
    %v419 = vadd.f32 %v278, %v418
    %v420 = vpop.f32.mrb[0].mxu0
    %v421 = vpop.f32.mrb[0].mxu0
    %v422 = vadd.f32 %v278, %v421
    %v423 = vpop.f32.mrb[0].mxu0
    %424 = vdwg.mxu0
    %v425 = vmax.f32 %v363, 0.0
    %v426 = vmax.f32 %v366, 0.0
    %v427 = vmax.f32 %v371, 0.0
    %v428 = vmax.f32 %v374, 0.0
    %v429 = vmax.f32 %v379, 0.0
    %v430 = vmax.f32 %v382, 0.0
    %v431 = vmax.f32 %v387, 0.0
    %v432 = vmax.f32 %v390, 0.0
    %v433 = vmax.f32 %v395, 0.0
    %v434 = vmax.f32 %v398, 0.0
    %v435 = vmax.f32 %v403, 0.0
    %v436 = vmax.f32 %v406, 0.0
    %v437 = vmax.f32 %v411, 0.0
    %v438 = vmax.f32 %v414, 0.0
    %v439 = vmax.f32 %v419, 0.0
    %v440 = vmax.f32 %v422, 0.0
    %v441 = vld [vmem:[#allocation2] sm:$0xf]
    %v442 = vld [vmem:[#allocation2 + $0x4] sm:$0xf]
    %v443 = vld [vmem:[#allocation2 + $0x8] sm:$0xf]
    %v444 = vld [vmem:[#allocation2 + $0xc] sm:$0xf]
    %v445 = vld [vmem:[#allocation2 + $0x10] sm:$0xf]
    %v446 = vld [vmem:[#allocation2 + $0x14] sm:$0xf]
    %v447 = vld [vmem:[#allocation2 + $0x18] sm:$0xf]
    %v448 = vld [vmem:[#allocation2 + $0x1c] sm:$0xf]
    %v449 = vld [vmem:[#allocation2 + $0x20] sm:$0xf]
    %v450 = vld [vmem:[#allocation2 + $0x24] sm:$0xf]
    %v451 = vld [vmem:[#allocation2 + $0x28] sm:$0xf]
    %v452 = vld [vmem:[#allocation2 + $0x2c] sm:$0xf]
    %v453 = vld [vmem:[#allocation2 + $0x30] sm:$0xf]
    %v454 = vld [vmem:[#allocation2 + $0x34] sm:$0xf]
    %v455 = vld [vmem:[#allocation2 + $0x38] sm:$0xf]
    %v456 = vld [vmem:[#allocation2 + $0x3c] sm:$0xf]
    %v457 = vld [vmem:[%s6] sm:$0x1]
    %v458 = vpack.c.bf16 %v426, %v425
    %v459 = vpack.c.bf16 %v428, %v427
    %v460 = vpack.c.bf16 %v430, %v429
    %v461 = vpack.c.bf16 %v432, %v431
    %v462 = vpack.c.bf16 %v434, %v433
    %v463 = vpack.c.bf16 %v436, %v435
    %v464 = vpack.c.bf16 %v438, %v437
    %v465 = vpack.c.bf16 %v440, %v439
    %v467 = vlaneseq
    %v468 = vshrl.u32 %v467, 7
    %v469 = vsub.s32 0, %v468
    %v470 = vrot.slane %v457, %v469
    %v488 = vunpack.c.l.b16 %v441
    %v489 = vunpack.c.l.b16 %v442
    %v490 = vunpack.c.l.b16 %v443
    %v491 = vunpack.c.l.b16 %v444
    %v492 = vunpack.c.l.b16 %v445
    %v493 = vunpack.c.l.b16 %v446
    %v494 = vunpack.c.l.b16 %v447
    %v495 = vunpack.c.l.b16 %v448
    %v496 = vunpack.c.l.b16 %v449
    %v497 = vunpack.c.l.b16 %v450
    %v498 = vunpack.c.l.b16 %v451
    %v499 = vunpack.c.l.b16 %v452
    %v500 = vunpack.c.l.b16 %v453
    %v501 = vunpack.c.l.b16 %v454
    %v502 = vunpack.c.l.b16 %v455
    %v503 = vunpack.c.l.b16 %v456
    %v504 = vpack.c.b16 %v489, %v488
    %v505 = vpack.c.b16 %v491, %v490
    %v506 = vpack.c.b16 %v493, %v492
    %v507 = vpack.c.b16 %v495, %v494
    %v508 = vpack.c.b16 %v497, %v496
    %v509 = vpack.c.b16 %v499, %v498
    %v510 = vpack.c.b16 %v501, %v500
    %v511 = vpack.c.b16 %v503, %v502
    %520 = vmatprep.subr.bf16.mxu0 0
    %521 = vmatpush1.bf16.msra.mxu0 %v504
    %522 = vmatprep.subr.bf16.mxu0 0
    %523 = vmatpush1.bf16.msra.mxu0 %v505
    %524 = vmatprep.subr.bf16.mxu0 0
    %525 = vmatpush1.bf16.msra.mxu0 %v506
    %526 = vmatprep.subr.bf16.mxu0 0
    %527 = vmatpush1.bf16.msra.mxu0 %v507
    %528 = vmatprep.subr.bf16.mxu0 0
    %529 = vmatpush1.bf16.msra.mxu0 %v508
    %530 = vmatprep.subr.bf16.mxu0 0
    %531 = vmatpush1.bf16.msra.mxu0 %v509
    %532 = vmatprep.subr.bf16.mxu0 0
    %533 = vmatpush1.bf16.msra.mxu0 %v510
    %534 = vmatprep.subr.bf16.mxu0 0
    %535 = vmatpush1.bf16.msra.mxu0 %v511
    %536 = vmatprep.subr.bf16.mxu0 0
    %537 = vmatpush1.bf16.msra.mxu0 0
    %538 = vmatprep.subr.bf16.mxu0 0
    %539 = vmatpush1.bf16.msra.mxu0 0
    %540 = vmatprep.subr.bf16.mxu0 0
    %541 = vmatpush1.bf16.msra.mxu0 0
    %542 = vmatprep.subr.bf16.mxu0 0
    %543 = vmatpush1.bf16.msra.mxu0 0
    %544 = vmatprep.subr.bf16.mxu0 0
    %545 = vmatpush1.bf16.msra.mxu0 0
    %546 = vmatprep.subr.bf16.mxu0 0
    %547 = vmatpush1.bf16.msra.mxu0 0
    %548 = vmatprep.subr.bf16.mxu0 0
    %549 = vmatpush1.bf16.msra.mxu0 0
    %550 = vmatprep.subr.bf16.mxu0 0
    %551 = vmatpush1.bf16.msra.mxu0 0
    %552 = vmatprep.mubr.bf16.mxu0 0
    %553 = vmatmul.mubr.bf16.gmra.mrb[0].mxu0 %v458
    %v554 = vpop.f32.mrb[0].mxu0
    %v555 = vadd.f32 %v470, %v554
    %v556 = vpop.f32.mrb[0].mxu0
    %v557 = vpop.f32.mrb[0].mxu0
    %v558 = vadd.f32 %v470, %v557
    %v559 = vpop.f32.mrb[0].mxu0
    %560 = vmatprep.mubr.bf16.mxu0 0
    %561 = vmatmul.mubr.bf16.gmra.mrb[0].mxu0 %v459
    %v562 = vpop.f32.mrb[0].mxu0
    %v563 = vadd.f32 %v470, %v562
    %v564 = vpop.f32.mrb[0].mxu0
    %v565 = vpop.f32.mrb[0].mxu0
    %v566 = vadd.f32 %v470, %v565
    %v567 = vpop.f32.mrb[0].mxu0
    %568 = vmatprep.mubr.bf16.mxu0 0
    %569 = vmatmul.mubr.bf16.gmra.mrb[0].mxu0 %v460
    %v570 = vpop.f32.mrb[0].mxu0
    %v571 = vadd.f32 %v470, %v570
    %v572 = vpop.f32.mrb[0].mxu0
    %v573 = vpop.f32.mrb[0].mxu0
    %v574 = vadd.f32 %v470, %v573
    %v575 = vpop.f32.mrb[0].mxu0
    %576 = vmatprep.mubr.bf16.mxu0 0
    %577 = vmatmul.mubr.bf16.gmra.mrb[0].mxu0 %v461
    %v578 = vpop.f32.mrb[0].mxu0
    %v579 = vadd.f32 %v470, %v578
    %v580 = vpop.f32.mrb[0].mxu0
    %v581 = vpop.f32.mrb[0].mxu0
    %v582 = vadd.f32 %v470, %v581
    %v583 = vpop.f32.mrb[0].mxu0
    %584 = vmatprep.mubr.bf16.mxu0 0
    %585 = vmatmul.mubr.bf16.gmra.mrb[0].mxu0 %v462
    %v586 = vpop.f32.mrb[0].mxu0
    %v587 = vadd.f32 %v470, %v586
    %v588 = vpop.f32.mrb[0].mxu0
    %v589 = vpop.f32.mrb[0].mxu0
    %v590 = vadd.f32 %v470, %v589
    %v591 = vpop.f32.mrb[0].mxu0
    %592 = vmatprep.mubr.bf16.mxu0 0
    %593 = vmatmul.mubr.bf16.gmra.mrb[0].mxu0 %v463
    %v594 = vpop.f32.mrb[0].mxu0
    %v595 = vadd.f32 %v470, %v594
    %v596 = vpop.f32.mrb[0].mxu0
    %v597 = vpop.f32.mrb[0].mxu0
    %v598 = vadd.f32 %v470, %v597
    %v599 = vpop.f32.mrb[0].mxu0
    %600 = vmatprep.mubr.bf16.mxu0 0
    %601 = vmatmul.mubr.bf16.gmra.mrb[0].mxu0 %v464
    %v602 = vpop.f32.mrb[0].mxu0
    %v603 = vadd.f32 %v470, %v602
    %v604 = vpop.f32.mrb[0].mxu0
    %v605 = vpop.f32.mrb[0].mxu0
    %v606 = vadd.f32 %v470, %v605
    %v607 = vpop.f32.mrb[0].mxu0
    %608 = vmatprep.mubr.bf16.mxu0 0
    %609 = vmatmul.mubr.bf16.gmra.mrb[0].mxu0 %v465
    %v610 = vpop.f32.mrb[0].mxu0
    %v611 = vadd.f32 %v470, %v610
    %v612 = vpop.f32.mrb[0].mxu0
    %v613 = vpop.f32.mrb[0].mxu0
    %v614 = vadd.f32 %v470, %v613
    %v615 = vpop.f32.mrb[0].mxu0
    %616 = vdwg.mxu0
    %v617 = vtanh.pop %v555
    %v618 = vtanh.pop %v558
    %v619 = vtanh.pop %v563
    %v620 = vtanh.pop %v566
    %v621 = vtanh.pop %v571
    %v622 = vtanh.pop %v574
    %v623 = vtanh.pop %v579
    %v624 = vtanh.pop %v582
    %v625 = vtanh.pop %v587
    %v626 = vtanh.pop %v590
    %v627 = vtanh.pop %v595
    %v628 = vtanh.pop %v598
    %v629 = vtanh.pop %v603
    %v630 = vtanh.pop %v606
    %v631 = vtanh.pop %v611
    %v632 = vtanh.pop %v614
    %633 = vst [vmem:[%s7] sm:$0xff] %v617
    %634 = vst [vmem:[%s7 + $0x8] sm:$0xff] %v618
    %635 = vst [vmem:[%s7 + $0x10] sm:$0xff] %v619
    %636 = vst [vmem:[%s7 + $0x18] sm:$0xff] %v620
    %637 = vst [vmem:[%s7 + $0x20] sm:$0xff] %v621
    %638 = vst [vmem:[%s7 + $0x28] sm:$0xff] %v622
    %639 = vst [vmem:[%s7 + $0x30] sm:$0xff] %v623
    %640 = vst [vmem:[%s7 + $0x38] sm:$0xff] %v624
    %641 = vst [vmem:[%s7 + $0x40] sm:$0xff] %v625
    %642 = vst [vmem:[%s7 + $0x48] sm:$0xff] %v626
    %643 = vst [vmem:[%s7 + $0x50] sm:$0xff] %v627
    %644 = vst [vmem:[%s7 + $0x58] sm:$0xff] %v628
    %645 = vst [vmem:[%s7 + $0x60] sm:$0xff] %v629
    %646 = vst [vmem:[%s7 + $0x68] sm:$0xff] %v630
    %647 = vst [vmem:[%s7 + $0x70] sm:$0xff] %v631
    %648 = vst [vmem:[%s7 + $0x78] sm:$0xff] %v632
    // Predicated region
    $region34: #{_generator_forward_impl.1} parent=1 // pred_check
      _
    $region35: #{_generator_forward_impl.1} parent=1 // pred_check_branch
      %650 = sbr.rel (0) target = $region37
    $region36: #{_generator_forward_impl.1} parent=1 // pred_region
      _
    $region37: #{_generator_forward_impl.1} parent=1 // pred_fallthru
      _
    // Predicated region
    $region38: #{_generator_forward_impl.1} parent=1 // pred_check
      _
    $region39: #{_generator_forward_impl.1} parent=1 // pred_check_branch
      %652 = sbr.rel (0) target = $region41
    $region40: #{_generator_forward_impl.1} parent=1 // pred_region
      _
    $region41: #{_generator_forward_impl.1} parent=1 // pred_fallthru
      _
    %653 = vsyncpa [#allocation3], 1

</llo_original>
